<compile_context>
chip_gen: v5e
topology: v5e:2x2
jax: 0.10.0
libtpu: 0.0.40
codegen_flags: <defaults>
</compile_context>

<pallas_src>
import math
import jax
import jax.numpy as jnp
from jax.experimental import pallas as pl
from jax.experimental.pallas import tpu as pltpu


def _round_up(x, m):
    return ((x + m - 1) // m) * m


# ---------------------------------------------------------------------------
# Kernels
# ---------------------------------------------------------------------------

def ffn_resident_kernel(x_ref, w1_ref, b1_ref, w2_ref, b2_ref, o_ref):
    """Weight-resident path: full-width W1^T / W2^T stay in VMEM for the whole
    call (constant index_map => fetched once). 1-D grid over row tiles."""
    x = x_ref[...].astype(w1_ref.dtype)                 # in-kernel bf16 cast
    h = jnp.dot(x, w1_ref[...], preferred_element_type=jnp.float32)
    h = jnp.maximum(h + b1_ref[...], 0.0)               # bias + ReLU (f32)
    # Dropout == identity (eval mode).
    # TODO(synk): training-mode dropout (pltpu.prng_seed / prng_random_bits +
    #             mask scaled by 1/(1-p)) not wired in.
    y = jnp.dot(h.astype(w2_ref.dtype), w2_ref[...],
                preferred_element_type=jnp.float32)
    o_ref[...] = (y + b2_ref[...]).astype(o_ref.dtype)


def ffn_streaming_kernel(x_ref, w1_ref, b1_ref, w2_ref, b2_ref, o_ref, acc_ref):
    """Streaming path for weights too large for VMEM: 2-D grid
    (row tiles [parallel], d_ff tiles [arbitrary, innermost]), f32 accumulator
    zeroed on the first d_ff step and finalized on the last."""
    k = pl.program_id(1)

    @pl.when(k == 0)
    def _():
        acc_ref[...] = jnp.zeros_like(acc_ref)

    x = x_ref[...].astype(w1_ref.dtype)
    h = jnp.dot(x, w1_ref[...], preferred_element_type=jnp.float32)
    h = jnp.maximum(h + b1_ref[...], 0.0)                # bias + ReLU (f32)
    # Dropout == identity (eval mode).
    acc_ref[...] += jnp.dot(h.astype(w2_ref.dtype), w2_ref[...],
                            preferred_element_type=jnp.float32)

    @pl.when(k == pl.num_programs(1) - 1)
    def _():
        o_ref[...] = (acc_ref[...] + b2_ref[...]).astype(o_ref.dtype)


# ---------------------------------------------------------------------------
# One-time parameter prep (call OUTSIDE the per-step path)
# ---------------------------------------------------------------------------

def prepare_ffn_params(w1, b1, w2, b2, *, compute_dtype=jnp.bfloat16):
    """PyTorch nn.Linear layout in:
      w1: (d_ff, d_model), b1: (d_ff,), w2: (d_model, d_ff), b2: (d_model,)
    Returns 128-padded, transposed, compute_dtype weights and f32 biases."""
    d_ff, d_model = w1.shape
    dm_pad = _round_up(d_model, 128)
    dff_pad = _round_up(d_ff, 128)

    w1_t = jnp.zeros((dm_pad, dff_pad), compute_dtype)
    w1_t = w1_t.at[:d_model, :d_ff].set(jnp.transpose(w1).astype(compute_dtype))
    w2_t = jnp.zeros((dff_pad, dm_pad), compute_dtype)
    w2_t = w2_t.at[:d_ff, :d_model].set(jnp.transpose(w2).astype(compute_dtype))
    b1_p = jnp.zeros((1, dff_pad), jnp.float32).at[0, :d_ff].set(
        b1.astype(jnp.float32))
    b2_p = jnp.zeros((1, dm_pad), jnp.float32).at[0, :d_model].set(
        b2.astype(jnp.float32))
    return w1_t, b1_p, w2_t, b2_p


# ---------------------------------------------------------------------------
# Tile / budget selection
# ---------------------------------------------------------------------------

def _vmem_budget_bytes():
    try:
        cap = int(pltpu.get_tpu_info().vmem_capacity_bytes)
    except Exception:
        cap = 64 << 20            # conservative fallback (v7x per-TC VMEM)
    # Leave headroom for compiler scratch / semaphores: ~3/4 of physical,
    # capped at 96 MiB (v5e/v6e 128 MiB) -> ~48 MiB on v7x's 64 MiB VMEM.
    return min(cap * 3 // 4, 96 << 20)


def _resident_bytes(tm, dm_pad, dff_pad, x_itm, out_itm):
    w = 2 * dm_pad * dff_pad * 2 * 2        # W1^T + W2^T (bf16), buffer slack
    xio = tm * dm_pad * (x_itm + out_itm) * 2   # double-buffered x / out tiles
    hidden = tm * dff_pad * 4                   # f32 (tm, d_ff) intermediate
    bias = (dff_pad + dm_pad) * 4 * 2
    return w + xio + hidden + bias


def _streaming_bytes(tm, tkf, dm_pad, dff_pad, x_itm, out_itm):
    w = 2 * dm_pad * tkf * 2 * 2            # W1^T/W2^T slices, double-buffered
    xio = tm * dm_pad * (x_itm + out_itm) * 2
    acc = tm * dm_pad * 4
    hidden = tm * tkf * 4
    bias = (tkf + dm_pad) * 4 * 2
    return w + xio + acc + hidden + bias


def _row_tile_candidates(M):
    if M < 256:
        return [_round_up(max(M, 1), 8)]
    cands = [t for t in (1024, 512, 256, 128) if t <= _round_up(M, 128)]
    # v7x has 2 TensorCores: keep >= 2 tiles on the parallel (row) axis.
    multi = [t for t in cands if pl.cdiv(M, t) >= 2]
    return multi if multi else cands


# ---------------------------------------------------------------------------
# Wrapper
# ---------------------------------------------------------------------------

def positionwise_feed_forward(x, w1_t, b1_p, w2_t, b2_p, *,
                              force_streaming=False):
    """x: (B, S, d_model); weights pre-prepared via prepare_ffn_params."""
    B, S, d_model = x.shape
    dm_pad, dff_pad = w1_t.shape
    assert dm_pad % 128 == 0 and dff_pad % 128 == 0
    out_dtype = x.dtype
    x_itm = jnp.dtype(x.dtype).itemsize
    out_itm = jnp.dtype(out_dtype).itemsize

    M = B * S
    budget = _vmem_budget_bytes()
    tm_cands = _row_tile_candidates(M)

    # --- path + tile selection (largest row tile that fits the budget) ------
    resident_tm = None
    if not force_streaming:
        for t in tm_cands:
            if _resident_bytes(t, dm_pad, dff_pad, x_itm, out_itm) <= budget:
                resident_tm = t
                break

    if resident_tm is not None:
        use_resident = True
        tm, tkf = resident_tm, dff_pad
    else:
        use_resident = False
        tm, tkf = tm_cands[-1], 128
        for t in tm_cands:
            for cand in (2048, 1024, 512, 256, 128):   # 256-aligned preferred
                if (cand <= dff_pad and dff_pad % cand == 0 and
                        _streaming_bytes(t, cand, dm_pad, dff_pad,
                                         x_itm, out_itm) <= budget):
                    tm, tkf = t, cand
                    break
            else:
                continue
            break

    M_pad = _round_up(M, tm)
    n_row_tiles = M_pad // tm

    # --- activations: pad only when needed; dtype cast happens in-kernel ----
    x2d = x.reshape(M, d_model)
    padded = (M_pad != M) or (dm_pad != d_model)
    if padded:
        x2d = jnp.zeros((M_pad, dm_pad), x.dtype).at[:M, :d_model].set(x2d)

    flops = 2 * 2 * M_pad * dm_pad * dff_pad            # two matmuls
    w_bytes = (w1_t.size * w1_t.dtype.itemsize
               + w2_t.size * w2_t.dtype.itemsize)
    w_streams = 1 if use_resident else n_row_tiles      # re-streamed per row tile
    bytes_accessed = (x2d.size * jnp.dtype(x2d.dtype).itemsize
                      + w_bytes * w_streams
                      + b1_p.size * 4 + b2_p.size * 4
                      + M_pad * dm_pad * out_itm)

    if use_resident:
        grid = (n_row_tiles,)
        in_specs = [
            pl.BlockSpec((tm, dm_pad), lambda i: (i, 0)),        # x rows
            pl.BlockSpec((dm_pad, dff_pad), lambda i: (0, 0)),   # full W1^T
            pl.BlockSpec((1, dff_pad), lambda i: (0, 0)),        # b1
            pl.BlockSpec((dff_pad, dm_pad), lambda i: (0, 0)),   # full W2^T
            pl.BlockSpec((1, dm_pad), lambda i: (0, 0)),         # b2
        ]
        out_spec = pl.BlockSpec((tm, dm_pad), lambda i: (i, 0))
        scratch = []
        kernel = ffn_resident_kernel
        dim_sem = ("parallel",)
    else:
        grid = (n_row_tiles, dff_pad // tkf)
        in_specs = [
            pl.BlockSpec((tm, dm_pad), lambda i, k: (i, 0)),     # x rows
            pl.BlockSpec((dm_pad, tkf), lambda i, k: (0, k)),    # W1^T slice
            pl.BlockSpec((1, tkf), lambda i, k: (0, k)),         # b1 slice
            pl.BlockSpec((tkf, dm_pad), lambda i, k: (k, 0)),    # W2^T slice
            pl.BlockSpec((1, dm_pad), lambda i, k: (0, 0)),      # b2
        ]
        out_spec = pl.BlockSpec((tm, dm_pad), lambda i, k: (i, 0))
        scratch = [pltpu.VMEM((tm, dm_pad), jnp.float32)]
        kernel = ffn_streaming_kernel
        dim_sem = ("parallel", "arbitrary")

    out2d = pl.pallas_call(
        kernel,
        out_shape=jax.ShapeDtypeStruct((M_pad, dm_pad), out_dtype),
        grid_spec=pltpu.PrefetchScalarGridSpec(
            num_scalar_prefetch=0,
            grid=grid,
            in_specs=in_specs,
            out_specs=out_spec,
            scratch_shapes=scratch,
        ),
        compiler_params=pltpu.CompilerParams(
            dimension_semantics=dim_sem,
            vmem_limit_bytes=budget,
        ),
        cost_estimate=pl.CostEstimate(
            flops=flops, transcendentals=0, bytes_accessed=bytes_accessed),
    )(x2d, w1_t, b1_p, w2_t, b2_p)

    if padded:
        out2d = out2d[:M, :d_model]
    return out2d.reshape(B, S, d_model)


# ---------------------------------------------------------------------------
# Test harness
# ---------------------------------------------------------------------------

def init_linear_params(key, in_features, out_features, dtype=jnp.float32):
    """Deterministic init mimicking nn.Linear default (uniform +/- 1/sqrt(in))."""
    kw, kb = jax.random.split(key)
    bound = 1.0 / math.sqrt(in_features)
    w = jax.random.uniform(kw, (out_features, in_features), dtype,
                           minval=-bound, maxval=bound)
    b = jax.random.uniform(kb, (out_features,), dtype,
                           minval=-bound, maxval=bound)
    return w, b


if __name__ == "__main__":
    # Small shapes consistent with the module: x is (batch, seq, d_model).
    batch, seq, d_model, d_ff = 2, 8, 32, 64

    key = jax.random.PRNGKey(0)
    kx, k1, k2 = jax.random.split(key, 3)

    x = jax.random.normal(kx, (batch, seq, d_model), jnp.float32)
    w1, b1 = init_linear_params(k1, d_model, d_ff)   # self.w_1
    w2, b2 = init_linear_params(k2, d_ff, d_model)   # self.w_2

    # One-time parameter prep (transpose + pad + bf16 cast).
    params = prepare_ffn_params(w1, b1, w2, b2, compute_dtype=jnp.bfloat16)

    # Pure-JAX f32 reference (eval-mode dropout = identity). bf16 MXU operands
    # with f32 accumulation => looser tolerance than pure f32.
    ref = jnp.maximum(x @ w1.T + b1, 0.0) @ w2.T + b2

    # Weight-resident (primary) path.
    out = jax.block_until_ready(positionwise_feed_forward(x, *params))
    assert out.shape == (batch, seq, d_model)
    err = float(jnp.max(jnp.abs(out - ref)))
    assert jnp.allclose(out, ref, atol=3e-2, rtol=3e-2), err

    # Streaming / accumulator fallback path (exercised explicitly).
    out_s = jax.block_until_ready(
        positionwise_feed_forward(x, *params, force_streaming=True))
    err_s = float(jnp.max(jnp.abs(out_s - ref)))
    assert jnp.allclose(out_s, ref, atol=3e-2, rtol=3e-2), err_s

    print("KERNEL_OK")
</pallas_src>

<mosaic_0001>
module attributes {stable_mosaic.version = 11 : i64} {
  func.func @ffn_resident_kernel(%arg0: i32, %arg1: memref<16x128xf32, #tpu.memory_space<vmem>>, %arg2: memref<128x128xbf16, #tpu.memory_space<vmem>>, %arg3: memref<1x128xf32, #tpu.memory_space<vmem>>, %arg4: memref<128x128xbf16, #tpu.memory_space<vmem>>, %arg5: memref<1x128xf32, #tpu.memory_space<vmem>>, %arg6: memref<16x128xf32, #tpu.memory_space<vmem>>) attributes {dimension_semantics = [#tpu.dimension_semantics<parallel>], iteration_bounds = array<i64: 1>, scalar_prefetch = 0 : i64, scratch_operands = 0 : i64, tpu.core_type = #tpu.core_type<tc>, window_params = [{transform_indices = @transform_0, window_bounds = array<i64: 16, 128>}, {pipeline_mode = #tpu.pipeline_mode<synchronous>, transform_indices = @transform_1, window_bounds = array<i64: 128, 128>}, {pipeline_mode = #tpu.pipeline_mode<synchronous>, transform_indices = @transform_2, window_bounds = array<i64: 1, 128>}, {pipeline_mode = #tpu.pipeline_mode<synchronous>, transform_indices = @transform_3, window_bounds = array<i64: 128, 128>}, {pipeline_mode = #tpu.pipeline_mode<synchronous>, transform_indices = @transform_4, window_bounds = array<i64: 1, 128>}, {transform_indices = @transform_5, window_bounds = array<i64: 16, 128>}]} {
    %c0 = arith.constant 0 : index
    %c0_0 = arith.constant 0 : index
    %0 = vector.load %arg1[%c0, %c0_0] : memref<16x128xf32, #tpu.memory_space<vmem>>, vector<16x128xf32>
    %1 = arith.truncf %0 : vector<16x128xf32> to vector<16x128xbf16>
    %c0_1 = arith.constant 0 : index
    %c0_2 = arith.constant 0 : index
    %2 = vector.load %arg2[%c0_1, %c0_2] : memref<128x128xbf16, #tpu.memory_space<vmem>>, vector<128x128xbf16>
    %cst = arith.constant dense<0.000000e+00> : vector<16x128xf32>
    %3 = tpu.matmul %1, %2, %cst {dimension_numbers = #tpu.dot_dimension_numbers<[1], [0], [0], [1], [0, 0, 1, 1], [], []>} : vector<16x128xbf16>, vector<128x128xbf16>, vector<16x128xf32> -> vector<16x128xf32>
    %c0_3 = arith.constant 0 : index
    %c0_4 = arith.constant 0 : index
    %4 = vector.load %arg3[%c0_3, %c0_4] : memref<1x128xf32, #tpu.memory_space<vmem>>, vector<1x128xf32>
    %5 = vector.broadcast %4 : vector<1x128xf32> to vector<16x128xf32>
    %6 = arith.addf %3, %5 : vector<16x128xf32>
    %cst_5 = arith.constant 0.000000e+00 : f32
    %7 = vector.broadcast %cst_5 : f32 to vector<16x128xf32>
    %8 = arith.maximumf %6, %7 : vector<16x128xf32>
    %9 = arith.truncf %8 : vector<16x128xf32> to vector<16x128xbf16>
    %c0_6 = arith.constant 0 : index
    %c0_7 = arith.constant 0 : index
    %10 = vector.load %arg4[%c0_6, %c0_7] : memref<128x128xbf16, #tpu.memory_space<vmem>>, vector<128x128xbf16>
    %cst_8 = arith.constant dense<0.000000e+00> : vector<16x128xf32>
    %11 = tpu.matmul %9, %10, %cst_8 {dimension_numbers = #tpu.dot_dimension_numbers<[1], [0], [0], [1], [0, 0, 1, 1], [], []>} : vector<16x128xbf16>, vector<128x128xbf16>, vector<16x128xf32> -> vector<16x128xf32>
    %c0_9 = arith.constant 0 : index
    %c0_10 = arith.constant 0 : index
    %12 = vector.load %arg5[%c0_9, %c0_10] : memref<1x128xf32, #tpu.memory_space<vmem>>, vector<1x128xf32>
    %13 = vector.broadcast %12 : vector<1x128xf32> to vector<16x128xf32>
    %14 = arith.addf %11, %13 : vector<16x128xf32>
    %c0_11 = arith.constant 0 : index
    %c0_12 = arith.constant 0 : index
    %15 = vector.load %arg6[%c0_11, %c0_12] : memref<16x128xf32, #tpu.memory_space<vmem>>, vector<16x128xf32>
    tpu.vector_store %arg6[%c0_11, %c0_12], %14 {strides = array<i32>} : memref<16x128xf32, #tpu.memory_space<vmem>>, vector<16x128xf32>,
    return
  }
  func.func @transform_0(%arg0: i32) -> (i32, i32) {
    %c0_i32 = arith.constant 0 : i32
    %c0_i32_0 = arith.constant 0 : i32
    return %arg0, %c0_i32 : i32, i32
  }
  func.func @transform_1(%arg0: i32) -> (i32, i32) {
    %c0_i32 = arith.constant 0 : i32
    %c0_i32_0 = arith.constant 0 : i32
    %c0_i32_1 = arith.constant 0 : i32
    return %c0_i32, %c0_i32_0 : i32, i32
  }
  func.func @transform_2(%arg0: i32) -> (i32, i32) {
    %c0_i32 = arith.constant 0 : i32
    %c0_i32_0 = arith.constant 0 : i32
    %c0_i32_1 = arith.constant 0 : i32
    return %c0_i32, %c0_i32_0 : i32, i32
  }
  func.func @transform_3(%arg0: i32) -> (i32, i32) {
    %c0_i32 = arith.constant 0 : i32
    %c0_i32_0 = arith.constant 0 : i32
    %c0_i32_1 = arith.constant 0 : i32
    return %c0_i32, %c0_i32_0 : i32, i32
  }
  func.func @transform_4(%arg0: i32) -> (i32, i32) {
    %c0_i32 = arith.constant 0 : i32
    %c0_i32_0 = arith.constant 0 : i32
    %c0_i32_1 = arith.constant 0 : i32
    return %c0_i32, %c0_i32_0 : i32, i32
  }
  func.func @transform_5(%arg0: i32) -> (i32, i32) {
    %c0_i32 = arith.constant 0 : i32
    %c0_i32_0 = arith.constant 0 : i32
    return %arg0, %c0_i32 : i32, i32
  }
}

</mosaic_0001>

<llo_original>
// kernel: tpu_custom_call.1
$region0: #{tpu_custom_call.1}
  #allocation0 [shape = 'u32[]', space=smem, size = 0x4, offset = 0x4, fixed_abs, tag = 'smem constant byte address 0x4 - core index']
  #allocation1 [shape = 'u32[72,128]{1,0:T(1,128)}', space=vmem, size = 0x9000, scoped, tag = 'internal scratch']
  %s0 = inlined_call_operand.hbm [shape: f32[16,128], index: 0, kind: input, shape index: {}]
  %s1 = inlined_call_operand.hbm [shape: bf16[128,128], index: 1, kind: input, shape index: {}]
  %s2 = inlined_call_operand.vmem [shape: f32[1,128], index: 2, kind: input, shape index: {}]
  %s3 = inlined_call_operand.hbm [shape: bf16[128,128], index: 3, kind: input, shape index: {}]
  %s4 = inlined_call_operand.vmem [shape: f32[1,128], index: 4, kind: input, shape index: {}]
  %s5 = inlined_call_operand.hbm [shape: f32[16,128], index: 5, kind: output, shape index: {}]
  %s6 = sld [smem:[#allocation0]]
  $region42: #{tpu_custom_call.1} parent=0
    _
  %s8 = ssub.s32 1, %s6
  %s9 = scalar_select 0, %s8, %s6
  $region1: #{tpu_custom_call.1} parent=0
    #allocation2 [shape = 'u8[8192]{0}', space=vmem, size = 0x2000, scoped, tag = 'input window, operand 0, single buffered']
    #allocation3 [shape = 's32[1]{0}', space=sflag, size = 0x4, scoped, tag = 'scoped memory for tpu_custom_call.1']
    #allocation4 [shape = 's32[1]{0}', space=sflag, size = 0x4, scoped, tag = 'scoped memory for tpu_custom_call.1']
    #allocation5 [shape = 'u8[32768]{0}', space=vmem, size = 0x8000, scoped, tag = 'input window, operand 1, single buffered']
    #allocation6 [shape = 's32[1]{0}', space=sflag, size = 0x4, scoped, tag = 'scoped memory for tpu_custom_call.1']
    #allocation7 [shape = 'u8[32768]{0}', space=vmem, size = 0x8000, scoped, tag = 'input window, operand 3, single buffered']
    #allocation8 [shape = 'u8[8192]{0}', space=vmem, size = 0x2000, scoped, tag = 'output window, operand 0, single buffered']
    %10 = vsyncpa [#allocation3], 0
    %11 = vsyncpa [#allocation6], 0
    %12 = vsyncpa [#allocation4], 0
    // Predicated region
    $region2: #{tpu_custom_call.1} parent=1 // pred_check
      _
    $region3: #{tpu_custom_call.1} parent=1 // pred_check_branch
      %14 = sbr.rel (0) target = $region5
    $region4: #{tpu_custom_call.1} parent=1 // pred_region
      %16 = vsyncadd [#allocation3], 0
      %s17 = sshll.u32 %s0, 4
      %s18 = int_to_ptr.hbm [resolvable:$true] %s17
      %s19 = sshll.u32 [#allocation2], 4
      %s20 = int_to_ptr.vmem [resolvable:$true] %s19
      %25 = dma.hbm_to_vmem [thread:$0]  %s18, 256, %s20, [#allocation3], 128, 128, 8
    $region5: #{tpu_custom_call.1} parent=1 // pred_fallthru
      _
    // Predicated region
    $region6: #{tpu_custom_call.1} parent=1 // pred_check
      _
    $region7: #{tpu_custom_call.1} parent=1 // pred_check_branch
      %27 = sbr.rel (0) target = $region9
    $region8: #{tpu_custom_call.1} parent=1 // pred_region
      %29 = vsyncadd [#allocation6], 0
      %s30 = sshll.u32 %s1, 4
      %s31 = int_to_ptr.hbm [resolvable:$true] %s30
      %s32 = sshll.u32 [#allocation5], 4
      %s33 = int_to_ptr.vmem [resolvable:$true] %s32
      %38 = dma.hbm_to_vmem [thread:$0]  %s31, 1024, %s33, [#allocation6], 64, 64, 4
    $region9: #{tpu_custom_call.1} parent=1 // pred_fallthru
      _
    // Predicated region
    $region10: #{tpu_custom_call.1} parent=1 // pred_check
      _
    $region11: #{tpu_custom_call.1} parent=1 // pred_check_branch
      %40 = sbr.rel (0) target = $region13
    $region12: #{tpu_custom_call.1} parent=1 // pred_region
      _
    $region13: #{tpu_custom_call.1} parent=1 // pred_fallthru
      _
    // Predicated region
    $region14: #{tpu_custom_call.1} parent=1 // pred_check
      _
    $region15: #{tpu_custom_call.1} parent=1 // pred_check_branch
      %42 = sbr.rel (0) target = $region17
    $region16: #{tpu_custom_call.1} parent=1 // pred_region
      %44 = vsyncadd [#allocation6], 0
      %s45 = sshll.u32 %s3, 4
      %s46 = int_to_ptr.hbm [resolvable:$true] %s45
      %s47 = sshll.u32 [#allocation7], 4
      %s48 = int_to_ptr.vmem [resolvable:$true] %s47
      %53 = dma.hbm_to_vmem [thread:$0]  %s46, 1024, %s48, [#allocation6], 64, 64, 4
    $region17: #{tpu_custom_call.1} parent=1 // pred_fallthru
      _
    // Predicated region
    $region18: #{tpu_custom_call.1} parent=1 // pred_check
      _
    $region19: #{tpu_custom_call.1} parent=1 // pred_check_branch
      %55 = sbr.rel (0) target = $region21
    $region20: #{tpu_custom_call.1} parent=1 // pred_region
      _
    $region21: #{tpu_custom_call.1} parent=1 // pred_fallthru
      _
    // Predicated region
    $region22: #{tpu_custom_call.1} parent=1 // pred_check
      _
    $region23: #{tpu_custom_call.1} parent=1 // pred_check_branch
      %57 = sbr.rel (0) target = $region25
    $region24: #{tpu_custom_call.1} parent=1 // pred_region
      %59 = dma.done [#allocation3], 256
    $region25: #{tpu_custom_call.1} parent=1 // pred_fallthru
      _
    // Predicated region
    $region26: #{tpu_custom_call.1} parent=1 // pred_check
      _
    $region27: #{tpu_custom_call.1} parent=1 // pred_check_branch
      %61 = sbr.rel (0) target = $region29
    $region28: #{tpu_custom_call.1} parent=1 // pred_region
      %63 = dma.done [#allocation6], 1024
    $region29: #{tpu_custom_call.1} parent=1 // pred_fallthru
      _
    // Predicated region
    $region30: #{tpu_custom_call.1} parent=1 // pred_check
      _
    $region31: #{tpu_custom_call.1} parent=1 // pred_check_branch
      %65 = sbr.rel (0) target = $region33
    $region32: #{tpu_custom_call.1} parent=1 // pred_region
      %67 = dma.done [#allocation6], 1024
    $region33: #{tpu_custom_call.1} parent=1 // pred_fallthru
      _
    %v68 = vld [vmem:[#allocation2] sm:$0xff]
    %v69 = vld [vmem:[#allocation2 + $0x8] sm:$0xff]
    %v70 = vpack.c.bf16 %v69, %v68
    %v71 = vld [vmem:[#allocation5] sm:$0xf]
    %v72 = vld [vmem:[#allocation5 + $0x4] sm:$0xf]
    %v73 = vld [vmem:[#allocation5 + $0x8] sm:$0xf]
    %v74 = vld [vmem:[#allocation5 + $0xc] sm:$0xf]
    %v75 = vld [vmem:[#allocation5 + $0x10] sm:$0xf]
    %v76 = vld [vmem:[#allocation5 + $0x14] sm:$0xf]
    %v77 = vld [vmem:[#allocation5 + $0x18] sm:$0xf]
    %v78 = vld [vmem:[#allocation5 + $0x1c] sm:$0xf]
    %v79 = vld [vmem:[#allocation5 + $0x20] sm:$0xf]
    %v80 = vld [vmem:[#allocation5 + $0x24] sm:$0xf]
    %v81 = vld [vmem:[#allocation5 + $0x28] sm:$0xf]
    %v82 = vld [vmem:[#allocation5 + $0x2c] sm:$0xf]
    %v83 = vld [vmem:[#allocation5 + $0x30] sm:$0xf]
    %v84 = vld [vmem:[#allocation5 + $0x34] sm:$0xf]
    %v85 = vld [vmem:[#allocation5 + $0x38] sm:$0xf]
    %v86 = vld [vmem:[#allocation5 + $0x3c] sm:$0xf]
    %v87 = vld [vmem:[%s2] sm:$0x1]
    %v89 = vperm.slane %v87, 0
    %v107 = vunpack.c.l.b16 %v71
    %v108 = vunpack.c.l.b16 %v72
    %v109 = vunpack.c.l.b16 %v73
    %v110 = vunpack.c.l.b16 %v74
    %v111 = vunpack.c.l.b16 %v75
    %v112 = vunpack.c.l.b16 %v76
    %v113 = vunpack.c.l.b16 %v77
    %v114 = vunpack.c.l.b16 %v78
    %v115 = vunpack.c.l.b16 %v79
    %v116 = vunpack.c.l.b16 %v80
    %v117 = vunpack.c.l.b16 %v81
    %v118 = vunpack.c.l.b16 %v82
    %v119 = vunpack.c.l.b16 %v83
    %v120 = vunpack.c.l.b16 %v84
    %v121 = vunpack.c.l.b16 %v85
    %v122 = vunpack.c.l.b16 %v86
    %v123 = vpack.c.b16 %v108, %v107
    %v124 = vpack.c.b16 %v110, %v109
    %v125 = vpack.c.b16 %v112, %v111
    %v126 = vpack.c.b16 %v114, %v113
    %v127 = vpack.c.b16 %v116, %v115
    %v128 = vpack.c.b16 %v118, %v117
    %v129 = vpack.c.b16 %v120, %v119
    %v130 = vpack.c.b16 %v122, %v121
    %139 = vmatpush.bf16.msra.mxu0 %v130
    %140 = vmatpush.bf16.msra.mxu0 %v129
    %141 = vmatpush.bf16.msra.mxu0 %v128
    %142 = vmatpush.bf16.msra.mxu0 %v127
    %143 = vmatpush.bf16.msra.mxu0 %v126
    %144 = vmatpush.bf16.msra.mxu0 %v125
    %145 = vmatpush.bf16.msra.mxu0 %v124
    %146 = vmatpush.bf16.msra.mxu0 %v123
    %147 = vmatmul.bf16.gmra.mxu0 %v70
    %v148 = vpop.f32.mrf.mxu0
    %v149 = vadd.f32 %v89, %v148
    %v150 = vpop.f32.mrf.mxu0
    %v151 = vadd.f32 %v89, %v150
    %152 = vdwg.mxu0
    %v153 = vmax.f32 %v149, 0.0
    %v154 = vmax.f32 %v151, 0.0
    %v155 = vpack.c.bf16 %v154, %v153
    %v156 = vld [vmem:[#allocation7] sm:$0xf]
    %v157 = vld [vmem:[#allocation7 + $0x4] sm:$0xf]
    %v158 = vld [vmem:[#allocation7 + $0x8] sm:$0xf]
    %v159 = vld [vmem:[#allocation7 + $0xc] sm:$0xf]
    %v160 = vld [vmem:[#allocation7 + $0x10] sm:$0xf]
    %v161 = vld [vmem:[#allocation7 + $0x14] sm:$0xf]
    %v162 = vld [vmem:[#allocation7 + $0x18] sm:$0xf]
    %v163 = vld [vmem:[#allocation7 + $0x1c] sm:$0xf]
    %v164 = vld [vmem:[#allocation7 + $0x20] sm:$0xf]
    %v165 = vld [vmem:[#allocation7 + $0x24] sm:$0xf]
    %v166 = vld [vmem:[#allocation7 + $0x28] sm:$0xf]
    %v167 = vld [vmem:[#allocation7 + $0x2c] sm:$0xf]
    %v168 = vld [vmem:[#allocation7 + $0x30] sm:$0xf]
    %v169 = vld [vmem:[#allocation7 + $0x34] sm:$0xf]
    %v170 = vld [vmem:[#allocation7 + $0x38] sm:$0xf]
    %v171 = vld [vmem:[#allocation7 + $0x3c] sm:$0xf]
    %v172 = vld [vmem:[%s4] sm:$0x1]
    %v174 = vperm.slane %v172, 0
    %v192 = vunpack.c.l.b16 %v156
    %v193 = vunpack.c.l.b16 %v157
    %v194 = vunpack.c.l.b16 %v158
    %v195 = vunpack.c.l.b16 %v159
    %v196 = vunpack.c.l.b16 %v160
    %v197 = vunpack.c.l.b16 %v161
    %v198 = vunpack.c.l.b16 %v162
    %v199 = vunpack.c.l.b16 %v163
    %v200 = vunpack.c.l.b16 %v164
    %v201 = vunpack.c.l.b16 %v165
    %v202 = vunpack.c.l.b16 %v166
    %v203 = vunpack.c.l.b16 %v167
    %v204 = vunpack.c.l.b16 %v168
    %v205 = vunpack.c.l.b16 %v169
    %v206 = vunpack.c.l.b16 %v170
    %v207 = vunpack.c.l.b16 %v171
    %v208 = vpack.c.b16 %v193, %v192
    %v209 = vpack.c.b16 %v195, %v194
    %v210 = vpack.c.b16 %v197, %v196
    %v211 = vpack.c.b16 %v199, %v198
    %v212 = vpack.c.b16 %v201, %v200
    %v213 = vpack.c.b16 %v203, %v202
    %v214 = vpack.c.b16 %v205, %v204
    %v215 = vpack.c.b16 %v207, %v206
    %224 = vmatpush.bf16.msra.mxu0 %v215
    %225 = vmatpush.bf16.msra.mxu0 %v214
    %226 = vmatpush.bf16.msra.mxu0 %v213
    %227 = vmatpush.bf16.msra.mxu0 %v212
    %228 = vmatpush.bf16.msra.mxu0 %v211
    %229 = vmatpush.bf16.msra.mxu0 %v210
    %230 = vmatpush.bf16.msra.mxu0 %v209
    %231 = vmatpush.bf16.msra.mxu0 %v208
    %232 = vmatmul.bf16.gmra.mxu0 %v155
    %v233 = vpop.f32.mrf.mxu0
    %v234 = vadd.f32 %v174, %v233
    %v235 = vpop.f32.mrf.mxu0
    %v236 = vadd.f32 %v174, %v235
    %237 = vdwg.mxu0
    %238 = vst [vmem:[#allocation8] sm:$0xff] %v234
    %239 = vst [vmem:[#allocation8 + $0x8] sm:$0xff] %v236
    // Predicated region
    $region34: #{tpu_custom_call.1} parent=1 // pred_check
      _
    $region35: #{tpu_custom_call.1} parent=1 // pred_check_branch
      %241 = sbr.rel (0) target = $region37
    $region36: #{tpu_custom_call.1} parent=1 // pred_region
      %243 = vsyncadd [#allocation4], 0
      %s244 = sshll.u32 [#allocation8], 4
      %s245 = int_to_ptr.vmem [resolvable:$true] %s244
      %s246 = sshll.u32 %s5, 4
      %s247 = int_to_ptr.hbm [resolvable:$true] %s246
      %252 = dma.vmem_to_hbm [thread:$0]  %s245, 256, %s247, [#allocation4], 128, 128, 8
    $region37: #{tpu_custom_call.1} parent=1 // pred_fallthru
      _
    // Predicated region
    $region38: #{tpu_custom_call.1} parent=1 // pred_check
      _
    $region39: #{tpu_custom_call.1} parent=1 // pred_check_branch
      %254 = sbr.rel (0) target = $region41
    $region40: #{tpu_custom_call.1} parent=1 // pred_region
      %256 = dma.done [#allocation4], 256
    $region41: #{tpu_custom_call.1} parent=1 // pred_fallthru
      _
    %257 = vsyncpa [#allocation3], 1
    %258 = vsyncpa [#allocation6], 1
    %259 = vsyncpa [#allocation4], 1

</llo_original>
